<compile_context>
chip_gen: v7x
topology: tpu7x:2x2x1
jax: 0.10.0
libtpu: 0.0.40
codegen_flags: <defaults>
</compile_context>

<pallas_src>
import numpy as np
import jax
import jax.numpy as jnp
from jax.experimental import pallas as pl

DIMENSION = 4
HIDDEN = 8
EPS = 0.1
BATCH = 8

# -------------------- packed-parameter layout (rows 8-aligned) ----------------
_P_COLS = 3 * HIDDEN + DIMENSION          # 28 = widest fused matrix (h1-stage)
_R_WX, _R_BX = 0, 8                       # (D, 2H+D)  [x_lat1 | c_in_mid | x_input]
_R_WH1, _R_BH1 = 16, 24                   # (H, 3H+D)  [x_lat2 | p1_mid | c1_mid | x_prop1]
_R_WH2, _R_BH2 = 32, 40                   # (H, 1+H+D) [x_lat_out | pout_mid | c_out_mid]
_R_WLAT = 48                              # (3D, 2H+1) block_diag(w_c_in, w_c1, w_c_out)
_R_WBO = 64                               # (H+D, 1)   [w_pout ; w_c_out]
_R_WB1 = 80                               # (H+D, H)   [w_p1   ; w_c1]
_R_WCIN = 96                              # (D, H)
_R_WP1 = 104                              # (H, H)
_R_WPOUT = 112                            # (H, 1)
_P_ROWS = 120


# ------------------------- kernel-side helpers --------------------------------
def _softplus(z):
    # numerically-stable softplus (Softplus default beta=1); exp/log1p hit the EUP
    return jnp.maximum(z, 0.0) + jnp.log1p(jnp.exp(-jnp.abs(z)))


def _sigmoid(z):
    # tanh routes through the EUP slot and saturates cleanly at +/- inf
    return 0.5 * (jnp.tanh(0.5 * z) + 1.0)


def _dot(a, b):    # a:(B,K) @ b:(K,N)   (weights stored (in, out))
    return jax.lax.dot_general(a, b, (((1,), (0,)), ((), ())),
                               preferred_element_type=jnp.float32)


def _dot_t(a, b):  # a:(B,N) @ b.T with b:(K,N) -> (B,K)   (VJP through act @ b)
    return jax.lax.dot_general(a, b, (((1,), (1,)), ((), ())),
                               preferred_element_type=jnp.float32)


# --------------------------------- kernel --------------------------------------
def _grad_dynamics_kernel(x_ref, p_ref, xdot_ref):
    D, H = DIMENSION, HIDDEN
    B = x_ref.shape[0]

    # ---- carve fused parameter views out of the single packed operand ----
    Wx = p_ref[_R_WX:_R_WX + D, 0:2 * H + D]
    bx = p_ref[_R_BX:_R_BX + 1, 0:2 * H + D]
    Wh1 = p_ref[_R_WH1:_R_WH1 + H, 0:3 * H + D]
    bh1 = p_ref[_R_BH1:_R_BH1 + 1, 0:3 * H + D]
    Wh2 = p_ref[_R_WH2:_R_WH2 + H, 0:1 + H + D]
    bh2 = p_ref[_R_BH2:_R_BH2 + 1, 0:1 + H + D]
    Wlat = p_ref[_R_WLAT:_R_WLAT + 3 * D, 0:2 * H + 1]
    Wbo = p_ref[_R_WBO:_R_WBO + H + D, 0:1]
    Wb1 = p_ref[_R_WB1:_R_WB1 + H + D, 0:H]
    wcin = p_ref[_R_WCIN:_R_WCIN + D, 0:H]
    wp1 = p_ref[_R_WP1:_R_WP1 + H, 0:H]
    wpout = p_ref[_R_WPOUT:_R_WPOUT + H, 0:1]

    x = x_ref[...]
    u = -jnp.log(x)                                         # x_star = dS/dx (x > 0)
    xs = jnp.concatenate([x, x], axis=0)                    # (2B, D)
    us = jnp.concatenate([u, jnp.zeros_like(u)], axis=0)    # [u ; 0] stacked on batch

    # ---- x-only stages: 3 fused GEMMs over the stacked batch ----
    X1 = _dot(xs, Wx) + bx                                  # (2B, 20)
    L1x = X1[:, 0:H]                                        # x_lateral_layer_1(x0)
    c0 = X1[:, H:H + D]                                     # conj_lateral_in_mid(x0)
    hx1 = _softplus(X1[:, H + D:2 * H + D])                 # sp(x_input_layer(x0))

    X2 = _dot(hx1, Wh1) + bh1                               # (2B, 28)
    L2x = X2[:, 0:H]                                        # x_lateral_layer_2
    m1 = _softplus(X2[:, H:2 * H])                          # sp(conj_prop_1_mid)
    c1 = X2[:, 2 * H:2 * H + D]                             # conj_lateral_1_mid
    hx2 = _softplus(X2[:, 2 * H + D:3 * H + D])             # sp(x_prop_layer1)

    X3 = _dot(hx2, Wh2) + bh2                               # (2B, 13)
    Lox = X3[:, 0:1]                                        # x_lateral_layer_out
    m2 = _softplus(X3[:, 1:1 + H])                          # sp(conj_prop_out_mid)
    c2 = X3[:, 1 + H:1 + H + D]                             # conj_lateral_out_mid

    # ---- lateral conjugate terms: single block-diagonal GEMM ----
    lat = _dot(jnp.concatenate([us * c0, us * c1, us * c2], axis=1), Wlat)  # (2B, 17)

    # ---- PICNN forward (u-dependent path) ----
    z1 = L1x + lat[:, 0:H]
    h1 = _softplus(z1)
    z2 = L2x + _dot(h1 * m1, wp1) + lat[:, H:2 * H]
    h2 = _softplus(z2)
    zo = Lox + _dot(h2 * m2, wpout) + lat[:, 2 * H:2 * H + 1]

    # ---- analytic VJP w.r.t. u (fused backward GEMMs) ----
    g_zo = _sigmoid(zo)                                     # dXi/dzo          (2B, 1)
    Go = _dot_t(g_zo, Wbo)                 # [:,0:H] = g_zo@wpout.T, [:,H:] = g_zo@wcout.T
    g_z2 = Go[:, 0:H] * m2 * _sigmoid(z2)                   # (2B, H)
    G1 = _dot_t(g_z2, Wb1)                 # [:,0:H] = g_z2@wp1.T,   [:,H:] = g_z2@wc1.T
    g_z1 = G1[:, 0:H] * m1 * _sigmoid(z1)                   # (2B, H)
    gcin = _dot_t(g_z1, wcin)                               # (2B, D)

    du = Go[:, H:H + D] * c2 + G1[:, H:H + D] * c1 + gcin * c0   # (2B, D)

    # x_dot = dXi_raw/du|_{u=x_star} - dXi_raw/du|_{u=0}
    xdot_ref[...] = du[0:B, :] - du[B:2 * B, :]


# --------------------------------- wrapper --------------------------------------
def gradient_dynamics(x, packed_params):
    # Single invocation (no grid): whole arrays in VMEM, 2 input DMAs total.
    # TODO(synk): if this op is stepped many times (ODE integration), add a grid
    # axis over steps/states with a constant index_map for the packed weights so
    # they stay VMEM-resident (and mark it "parallel" to use both v7x TCs).
    return pl.pallas_call(
        _grad_dynamics_kernel,
        out_shape=jax.ShapeDtypeStruct(x.shape, jnp.float32),
        in_specs=[
            pl.BlockSpec(x.shape, lambda: (0, 0)),
            pl.BlockSpec(packed_params.shape, lambda: (0, 0)),
        ],
        out_specs=pl.BlockSpec(x.shape, lambda: (0, 0)),
    )(x, packed_params)


# ------------------------- deterministic parameters -----------------------------
def make_params(key):
    # torch layers: (name, out_features, in_features, has_bias, is_positive_linear)
    layers = [
        ("x_input",   HIDDEN, DIMENSION, True,  False),
        ("x_prop1",   HIDDEN, HIDDEN,    True,  False),
        ("x_lat1",    HIDDEN, DIMENSION, True,  False),
        ("x_lat2",    HIDDEN, HIDDEN,    True,  False),
        ("x_lat_out", 1,      HIDDEN,    True,  False),
        ("p1",        HIDDEN, HIDDEN,    False, True),
        ("pout",      1,      HIDDEN,    False, True),
        ("p1_mid",    HIDDEN, HIDDEN,    True,  False),
        ("pout_mid",  HIDDEN, HIDDEN,    True,  False),
        ("c_in",      HIDDEN, DIMENSION, False, False),
        ("c1",        HIDDEN, DIMENSION, False, False),
        ("c_out",     1,      DIMENSION, False, False),
        ("c_in_mid",  DIMENSION, DIMENSION, True, False),
        ("c1_mid",    DIMENSION, HIDDEN,    True, False),
        ("c_out_mid", DIMENSION, HIDDEN,    True, False),
    ]
    params = {}
    keys = jax.random.split(key, len(layers))
    for k, (name, out_f, in_f, has_bias, positive) in zip(keys, layers):
        # kaiming_normal_ (fan_in, gain sqrt(2)); biases zero-initialized
        w = jax.random.normal(k, (out_f, in_f), jnp.float32) * jnp.sqrt(2.0 / in_f)
        if positive:
            # PositiveLinear reparameterization (done in glue, not the kernel)
            w = jnp.where(w >= 0, w + jnp.exp(-jnp.float32(EPS)),
                          jnp.exp(w - jnp.float32(EPS)))
        params["w_" + name] = w.T                      # store (in, out)
        if has_bias:
            params["b_" + name] = jnp.zeros((1, out_f), jnp.float32)
    return params


def pack_params(p):
    """Fuse same-LHS weights and pack everything into one (120, 28) f32 operand."""
    D, H = DIMENSION, HIDDEN
    Wx = jnp.concatenate([p["w_x_lat1"], p["w_c_in_mid"], p["w_x_input"]], axis=1)
    bx = jnp.concatenate([p["b_x_lat1"], p["b_c_in_mid"], p["b_x_input"]], axis=1)
    Wh1 = jnp.concatenate([p["w_x_lat2"], p["w_p1_mid"], p["w_c1_mid"],
                           p["w_x_prop1"]], axis=1)
    bh1 = jnp.concatenate([p["b_x_lat2"], p["b_p1_mid"], p["b_c1_mid"],
                           p["b_x_prop1"]], axis=1)
    Wh2 = jnp.concatenate([p["w_x_lat_out"], p["w_pout_mid"], p["w_c_out_mid"]], axis=1)
    bh2 = jnp.concatenate([p["b_x_lat_out"], p["b_pout_mid"], p["b_c_out_mid"]], axis=1)
    Wlat = jnp.zeros((3 * D, 2 * H + 1), jnp.float32)
    Wlat = Wlat.at[0:D, 0:H].set(p["w_c_in"])
    Wlat = Wlat.at[D:2 * D, H:2 * H].set(p["w_c1"])
    Wlat = Wlat.at[2 * D:3 * D, 2 * H:2 * H + 1].set(p["w_c_out"])
    Wbo = jnp.concatenate([p["w_pout"], p["w_c_out"]], axis=0)
    Wb1 = jnp.concatenate([p["w_p1"], p["w_c1"]], axis=0)

    P = jnp.zeros((_P_ROWS, _P_COLS), jnp.float32)
    for row, m in ((_R_WX, Wx), (_R_BX, bx), (_R_WH1, Wh1), (_R_BH1, bh1),
                   (_R_WH2, Wh2), (_R_BH2, bh2), (_R_WLAT, Wlat),
                   (_R_WBO, Wbo), (_R_WB1, Wb1), (_R_WCIN, p["w_c_in"]),
                   (_R_WP1, p["w_p1"]), (_R_WPOUT, p["w_pout"])):
        P = P.at[row:row + m.shape[0], 0:m.shape[1]].set(m)
    return P


# ------------------------- pure-JAX reference ------------------------------------
def _forward_raw_ref(p, x, u):
    sp = jax.nn.softplus
    x_star = sp(x @ p["w_x_lat1"] + p["b_x_lat1"]
                + (u * (x @ p["w_c_in_mid"] + p["b_c_in_mid"])) @ p["w_c_in"])
    h = sp(x @ p["w_x_input"] + p["b_x_input"])
    x_star = sp(h @ p["w_x_lat2"] + p["b_x_lat2"]
                + (x_star * sp(h @ p["w_p1_mid"] + p["b_p1_mid"])) @ p["w_p1"]
                + (u * (h @ p["w_c1_mid"] + p["b_c1_mid"])) @ p["w_c1"])
    h = sp(h @ p["w_x_prop1"] + p["b_x_prop1"])
    xi = sp(h @ p["w_x_lat_out"] + p["b_x_lat_out"]
            + (x_star * sp(h @ p["w_pout_mid"] + p["b_pout_mid"])) @ p["w_pout"]
            + (u * (h @ p["w_c_out_mid"] + p["b_c_out_mid"])) @ p["w_c_out"])
    return xi


def reference_xdot(p, x):
    x_star = jax.grad(lambda xx: -jnp.sum(xx * (jnp.log(xx) - 1.0)))(x)
    zeros = jnp.zeros_like(x)
    g0 = jax.grad(lambda z: jnp.sum(_forward_raw_ref(p, x, z)))(zeros)

    def total_xi(u):
        xi = (_forward_raw_ref(p, x, u) - _forward_raw_ref(p, x, zeros)
              - jnp.sum(u * g0, axis=-1, keepdims=True))
        return jnp.sum(xi)

    return jax.grad(total_xi)(x_star)


# ------------------------------------ main ----------------------------------------
if __name__ == "__main__":
    key = jax.random.PRNGKey(0)
    kp, kx = jax.random.split(key)
    params = make_params(kp)
    packed = pack_params(params)
    # entropy needs x > 0 (u = -log(x) is unguarded by design, as in the module)
    x = jax.random.uniform(kx, (BATCH, DIMENSION), jnp.float32,
                           minval=0.2, maxval=2.0)

    x_dot = jax.block_until_ready(gradient_dynamics(x, packed))

    # Accurate reference; kernel matmuls run at default (bf16-input) precision,
    # hence the relaxed tolerance.
    with jax.default_matmul_precision("highest"):
        ref = jax.block_until_ready(reference_xdot(params, x))

    np.testing.assert_allclose(np.asarray(x_dot), np.asarray(ref),
                               rtol=2e-2, atol=2e-3)
    print("KERNEL_OK")
</pallas_src>

<mosaic_0001>
module attributes {stable_mosaic.version = 11 : i64} {
  func.func @_grad_dynamics_kernel(%arg0: memref<8x4xf32, #tpu.memory_space<vmem>>, %arg1: memref<120x28xf32, #tpu.memory_space<vmem>>, %arg2: memref<8x4xf32, #tpu.memory_space<vmem>>) attributes {dimension_semantics = [], scalar_prefetch = 0 : i64, scratch_operands = 0 : i64, tpu.core_type = #tpu.core_type<tc>} {
    %c0 = arith.constant 0 : index
    %c0_0 = arith.constant 0 : index
    %0 = vector.load %arg1[%c0, %c0_0] : memref<120x28xf32, #tpu.memory_space<vmem>>, vector<4x20xf32>
    %c8 = arith.constant 8 : index
    %c0_1 = arith.constant 0 : index
    %1 = vector.load %arg1[%c8, %c0_1] : memref<120x28xf32, #tpu.memory_space<vmem>>, vector<1x20xf32>
    %c16 = arith.constant 16 : index
    %c0_2 = arith.constant 0 : index
    %2 = vector.load %arg1[%c16, %c0_2] : memref<120x28xf32, #tpu.memory_space<vmem>>, vector<8x28xf32>
    %c24 = arith.constant 24 : index
    %c0_3 = arith.constant 0 : index
    %3 = vector.load %arg1[%c24, %c0_3] : memref<120x28xf32, #tpu.memory_space<vmem>>, vector<1x28xf32>
    %c32 = arith.constant 32 : index
    %c0_4 = arith.constant 0 : index
    %4 = vector.load %arg1[%c32, %c0_4] : memref<120x28xf32, #tpu.memory_space<vmem>>, vector<8x13xf32>
    %c40 = arith.constant 40 : index
    %c0_5 = arith.constant 0 : index
    %5 = vector.load %arg1[%c40, %c0_5] : memref<120x28xf32, #tpu.memory_space<vmem>>, vector<1x13xf32>
    %c48 = arith.constant 48 : index
    %c0_6 = arith.constant 0 : index
    %6 = vector.load %arg1[%c48, %c0_6] : memref<120x28xf32, #tpu.memory_space<vmem>>, vector<12x17xf32>
    %c64 = arith.constant 64 : index
    %c0_7 = arith.constant 0 : index
    %7 = vector.load %arg1[%c64, %c0_7] : memref<120x28xf32, #tpu.memory_space<vmem>>, vector<12x1xf32>
    %c80 = arith.constant 80 : index
    %c0_8 = arith.constant 0 : index
    %8 = vector.load %arg1[%c80, %c0_8] : memref<120x28xf32, #tpu.memory_space<vmem>>, vector<12x8xf32>
    %c96 = arith.constant 96 : index
    %c0_9 = arith.constant 0 : index
    %9 = vector.load %arg1[%c96, %c0_9] : memref<120x28xf32, #tpu.memory_space<vmem>>, vector<4x8xf32>
    %c104 = arith.constant 104 : index
    %c0_10 = arith.constant 0 : index
    %10 = vector.load %arg1[%c104, %c0_10] : memref<120x28xf32, #tpu.memory_space<vmem>>, vector<8x8xf32>
    %c112 = arith.constant 112 : index
    %c0_11 = arith.constant 0 : index
    %11 = vector.load %arg1[%c112, %c0_11] : memref<120x28xf32, #tpu.memory_space<vmem>>, vector<8x1xf32>
    %c0_12 = arith.constant 0 : index
    %c0_13 = arith.constant 0 : index
    %12 = vector.load %arg0[%c0_12, %c0_13] : memref<8x4xf32, #tpu.memory_space<vmem>>, vector<8x4xf32>
    %13 = math.log %12 : vector<8x4xf32>
    %cst = arith.constant 0.000000e+00 : f32
    %14 = vector.broadcast %cst : f32 to vector<8x4xf32>
    %15 = arith.subf %14, %13 : vector<8x4xf32>
    %16 = tpu.concatenate %12, %12 in 0 : vector<8x4xf32>, vector<8x4xf32> -> vector<16x4xf32>
    %cst_14 = arith.constant 0.000000e+00 : f32
    %17 = vector.broadcast %cst_14 : f32 to vector<8x4xf32>
    %18 = tpu.concatenate %15, %17 in 0 : vector<8x4xf32>, vector<8x4xf32> -> vector<16x4xf32>
    %cst_15 = arith.constant dense<0.000000e+00> : vector<16x20xf32>
    %19 = tpu.matmul %16, %0, %cst_15 {dimension_numbers = #tpu.dot_dimension_numbers<[1], [0], [0], [1], [0, 0, 1, 1], [], []>} : vector<16x4xf32>, vector<4x20xf32>, vector<16x20xf32> -> vector<16x20xf32>
    %20 = vector.broadcast %1 : vector<1x20xf32> to vector<16x20xf32>
    %21 = arith.addf %19, %20 : vector<16x20xf32>
    %22 = vector.extract_strided_slice %21 {offsets = [0, 0], sizes = [16, 8], strides = [1, 1]} : vector<16x20xf32> to vector<16x8xf32>
    %23 = vector.extract_strided_slice %21 {offsets = [0, 8], sizes = [16, 4], strides = [1, 1]} : vector<16x20xf32> to vector<16x4xf32>
    %24 = vector.extract_strided_slice %21 {offsets = [0, 12], sizes = [16, 8], strides = [1, 1]} : vector<16x20xf32> to vector<16x8xf32>
    %cst_16 = arith.constant 0.000000e+00 : f32
    %25 = vector.broadcast %cst_16 : f32 to vector<16x8xf32>
    %26 = arith.maximumf %24, %25 : vector<16x8xf32>
    %27 = math.absf %24 : vector<16x8xf32>
    %cst_17 = arith.constant 0.000000e+00 : f32
    %28 = vector.broadcast %cst_17 : f32 to vector<16x8xf32>
    %29 = arith.subf %28, %27 : vector<16x8xf32>
    %30 = math.exp %29 : vector<16x8xf32>
    %31 = math.log1p %30 : vector<16x8xf32>
    %32 = arith.addf %26, %31 : vector<16x8xf32>
    %cst_18 = arith.constant dense<0.000000e+00> : vector<16x28xf32>
    %33 = tpu.matmul %32, %2, %cst_18 {dimension_numbers = #tpu.dot_dimension_numbers<[1], [0], [0], [1], [0, 0, 1, 1], [], []>} : vector<16x8xf32>, vector<8x28xf32>, vector<16x28xf32> -> vector<16x28xf32>
    %34 = vector.broadcast %3 : vector<1x28xf32> to vector<16x28xf32>
    %35 = arith.addf %33, %34 : vector<16x28xf32>
    %36 = vector.extract_strided_slice %35 {offsets = [0, 0], sizes = [16, 8], strides = [1, 1]} : vector<16x28xf32> to vector<16x8xf32>
    %37 = vector.extract_strided_slice %35 {offsets = [0, 8], sizes = [16, 8], strides = [1, 1]} : vector<16x28xf32> to vector<16x8xf32>
    %cst_19 = arith.constant 0.000000e+00 : f32
    %38 = vector.broadcast %cst_19 : f32 to vector<16x8xf32>
    %39 = arith.maximumf %37, %38 : vector<16x8xf32>
    %40 = math.absf %37 : vector<16x8xf32>
    %cst_20 = arith.constant 0.000000e+00 : f32
    %41 = vector.broadcast %cst_20 : f32 to vector<16x8xf32>
    %42 = arith.subf %41, %40 : vector<16x8xf32>
    %43 = math.exp %42 : vector<16x8xf32>
    %44 = math.log1p %43 : vector<16x8xf32>
    %45 = arith.addf %39, %44 : vector<16x8xf32>
    %46 = vector.extract_strided_slice %35 {offsets = [0, 16], sizes = [16, 4], strides = [1, 1]} : vector<16x28xf32> to vector<16x4xf32>
    %47 = vector.extract_strided_slice %35 {offsets = [0, 20], sizes = [16, 8], strides = [1, 1]} : vector<16x28xf32> to vector<16x8xf32>
    %cst_21 = arith.constant 0.000000e+00 : f32
    %48 = vector.broadcast %cst_21 : f32 to vector<16x8xf32>
    %49 = arith.maximumf %47, %48 : vector<16x8xf32>
    %50 = math.absf %47 : vector<16x8xf32>
    %cst_22 = arith.constant 0.000000e+00 : f32
    %51 = vector.broadcast %cst_22 : f32 to vector<16x8xf32>
    %52 = arith.subf %51, %50 : vector<16x8xf32>
    %53 = math.exp %52 : vector<16x8xf32>
    %54 = math.log1p %53 : vector<16x8xf32>
    %55 = arith.addf %49, %54 : vector<16x8xf32>
    %cst_23 = arith.constant dense<0.000000e+00> : vector<16x13xf32>
    %56 = tpu.matmul %55, %4, %cst_23 {dimension_numbers = #tpu.dot_dimension_numbers<[1], [0], [0], [1], [0, 0, 1, 1], [], []>} : vector<16x8xf32>, vector<8x13xf32>, vector<16x13xf32> -> vector<16x13xf32>
    %57 = vector.broadcast %5 : vector<1x13xf32> to vector<16x13xf32>
    %58 = arith.addf %56, %57 : vector<16x13xf32>
    %59 = vector.extract_strided_slice %58 {offsets = [0, 0], sizes = [16, 1], strides = [1, 1]} : vector<16x13xf32> to vector<16x1xf32>
    %60 = vector.extract_strided_slice %58 {offsets = [0, 1], sizes = [16, 8], strides = [1, 1]} : vector<16x13xf32> to vector<16x8xf32>
    %cst_24 = arith.constant 0.000000e+00 : f32
    %61 = vector.broadcast %cst_24 : f32 to vector<16x8xf32>
    %62 = arith.maximumf %60, %61 : vector<16x8xf32>
    %63 = math.absf %60 : vector<16x8xf32>
    %cst_25 = arith.constant 0.000000e+00 : f32
    %64 = vector.broadcast %cst_25 : f32 to vector<16x8xf32>
    %65 = arith.subf %64, %63 : vector<16x8xf32>
    %66 = math.exp %65 : vector<16x8xf32>
    %67 = math.log1p %66 : vector<16x8xf32>
    %68 = arith.addf %62, %67 : vector<16x8xf32>
    %69 = vector.extract_strided_slice %58 {offsets = [0, 9], sizes = [16, 4], strides = [1, 1]} : vector<16x13xf32> to vector<16x4xf32>
    %70 = arith.mulf %18, %23 : vector<16x4xf32>
    %71 = arith.mulf %18, %46 : vector<16x4xf32>
    %72 = arith.mulf %18, %69 : vector<16x4xf32>
    %73 = tpu.concatenate %70, %71, %72 in 1 : vector<16x4xf32>, vector<16x4xf32>, vector<16x4xf32> -> vector<16x12xf32>
    %cst_26 = arith.constant dense<0.000000e+00> : vector<16x17xf32>
    %74 = tpu.matmul %73, %6, %cst_26 {dimension_numbers = #tpu.dot_dimension_numbers<[1], [0], [0], [1], [0, 0, 1, 1], [], []>} : vector<16x12xf32>, vector<12x17xf32>, vector<16x17xf32> -> vector<16x17xf32>
    %75 = vector.extract_strided_slice %74 {offsets = [0, 0], sizes = [16, 8], strides = [1, 1]} : vector<16x17xf32> to vector<16x8xf32>
    %76 = arith.addf %22, %75 : vector<16x8xf32>
    %cst_27 = arith.constant 0.000000e+00 : f32
    %77 = vector.broadcast %cst_27 : f32 to vector<16x8xf32>
    %78 = arith.maximumf %76, %77 : vector<16x8xf32>
    %79 = math.absf %76 : vector<16x8xf32>
    %cst_28 = arith.constant 0.000000e+00 : f32
    %80 = vector.broadcast %cst_28 : f32 to vector<16x8xf32>
    %81 = arith.subf %80, %79 : vector<16x8xf32>
    %82 = math.exp %81 : vector<16x8xf32>
    %83 = math.log1p %82 : vector<16x8xf32>
    %84 = arith.addf %78, %83 : vector<16x8xf32>
    %85 = arith.mulf %84, %45 : vector<16x8xf32>
    %cst_29 = arith.constant dense<0.000000e+00> : vector<16x8xf32>
    %86 = tpu.matmul %85, %10, %cst_29 {dimension_numbers = #tpu.dot_dimension_numbers<[1], [0], [0], [1], [0, 0, 1, 1], [], []>} : vector<16x8xf32>, vector<8x8xf32>, vector<16x8xf32> -> vector<16x8xf32>
    %87 = arith.addf %36, %86 : vector<16x8xf32>
    %88 = vector.extract_strided_slice %74 {offsets = [0, 8], sizes = [16, 8], strides = [1, 1]} : vector<16x17xf32> to vector<16x8xf32>
    %89 = arith.addf %87, %88 : vector<16x8xf32>
    %cst_30 = arith.constant 0.000000e+00 : f32
    %90 = vector.broadcast %cst_30 : f32 to vector<16x8xf32>
    %91 = arith.maximumf %89, %90 : vector<16x8xf32>
    %92 = math.absf %89 : vector<16x8xf32>
    %cst_31 = arith.constant 0.000000e+00 : f32
    %93 = vector.broadcast %cst_31 : f32 to vector<16x8xf32>
    %94 = arith.subf %93, %92 : vector<16x8xf32>
    %95 = math.exp %94 : vector<16x8xf32>
    %96 = math.log1p %95 : vector<16x8xf32>
    %97 = arith.addf %91, %96 : vector<16x8xf32>
    %98 = arith.mulf %97, %68 : vector<16x8xf32>
    %cst_32 = arith.constant dense<0.000000e+00> : vector<16x1xf32>
    %99 = tpu.matmul %98, %11, %cst_32 {dimension_numbers = #tpu.dot_dimension_numbers<[1], [0], [0], [1], [0, 0, 1, 1], [], []>} : vector<16x8xf32>, vector<8x1xf32>, vector<16x1xf32> -> vector<16x1xf32>
    %100 = arith.addf %59, %99 : vector<16x1xf32>
    %101 = vector.extract_strided_slice %74 {offsets = [0, 16], sizes = [16, 1], strides = [1, 1]} : vector<16x17xf32> to vector<16x1xf32>
    %102 = arith.addf %100, %101 : vector<16x1xf32>
    %cst_33 = arith.constant 5.000000e-01 : f32
    %103 = vector.broadcast %cst_33 : f32 to vector<16x1xf32>
    %104 = arith.mulf %103, %102 : vector<16x1xf32>
    %105 = math.tanh %104 : vector<16x1xf32>
    %cst_34 = arith.constant 1.000000e+00 : f32
    %106 = vector.broadcast %cst_34 : f32 to vector<16x1xf32>
    %107 = arith.addf %105, %106 : vector<16x1xf32>
    %cst_35 = arith.constant 5.000000e-01 : f32
    %108 = vector.broadcast %cst_35 : f32 to vector<16x1xf32>
    %109 = arith.mulf %108, %107 : vector<16x1xf32>
    %cst_36 = arith.constant dense<0.000000e+00> : vector<16x12xf32>
    %110 = tpu.matmul %109, %7, %cst_36 {dimension_numbers = #tpu.dot_dimension_numbers<[1], [1], [0], [0], [0, 0, 1, 0], [], []>} : vector<16x1xf32>, vector<12x1xf32>, vector<16x12xf32> -> vector<16x12xf32>
    %111 = vector.extract_strided_slice %110 {offsets = [0, 0], sizes = [16, 8], strides = [1, 1]} : vector<16x12xf32> to vector<16x8xf32>
    %112 = arith.mulf %111, %68 : vector<16x8xf32>
    %cst_37 = arith.constant 5.000000e-01 : f32
    %113 = vector.broadcast %cst_37 : f32 to vector<16x8xf32>
    %114 = arith.mulf %113, %89 : vector<16x8xf32>
    %115 = math.tanh %114 : vector<16x8xf32>
    %cst_38 = arith.constant 1.000000e+00 : f32
    %116 = vector.broadcast %cst_38 : f32 to vector<16x8xf32>
    %117 = arith.addf %115, %116 : vector<16x8xf32>
    %cst_39 = arith.constant 5.000000e-01 : f32
    %118 = vector.broadcast %cst_39 : f32 to vector<16x8xf32>
    %119 = arith.mulf %118, %117 : vector<16x8xf32>
    %120 = arith.mulf %112, %119 : vector<16x8xf32>
    %cst_40 = arith.constant dense<0.000000e+00> : vector<16x12xf32>
    %121 = tpu.matmul %120, %8, %cst_40 {dimension_numbers = #tpu.dot_dimension_numbers<[1], [1], [0], [0], [0, 0, 1, 0], [], []>} : vector<16x8xf32>, vector<12x8xf32>, vector<16x12xf32> -> vector<16x12xf32>
    %122 = vector.extract_strided_slice %121 {offsets = [0, 0], sizes = [16, 8], strides = [1, 1]} : vector<16x12xf32> to vector<16x8xf32>
    %123 = arith.mulf %122, %45 : vector<16x8xf32>
    %cst_41 = arith.constant 5.000000e-01 : f32
    %124 = vector.broadcast %cst_41 : f32 to vector<16x8xf32>
    %125 = arith.mulf %124, %76 : vector<16x8xf32>
    %126 = math.tanh %125 : vector<16x8xf32>
    %cst_42 = arith.constant 1.000000e+00 : f32
    %127 = vector.broadcast %cst_42 : f32 to vector<16x8xf32>
    %128 = arith.addf %126, %127 : vector<16x8xf32>
    %cst_43 = arith.constant 5.000000e-01 : f32
    %129 = vector.broadcast %cst_43 : f32 to vector<16x8xf32>
    %130 = arith.mulf %129, %128 : vector<16x8xf32>
    %131 = arith.mulf %123, %130 : vector<16x8xf32>
    %cst_44 = arith.constant dense<0.000000e+00> : vector<16x4xf32>
    %132 = tpu.matmul %131, %9, %cst_44 {dimension_numbers = #tpu.dot_dimension_numbers<[1], [1], [0], [0], [0, 0, 1, 0], [], []>} : vector<16x8xf32>, vector<4x8xf32>, vector<16x4xf32> -> vector<16x4xf32>
    %133 = vector.extract_strided_slice %110 {offsets = [0, 8], sizes = [16, 4], strides = [1, 1]} : vector<16x12xf32> to vector<16x4xf32>
    %134 = arith.mulf %133, %69 : vector<16x4xf32>
    %135 = vector.extract_strided_slice %121 {offsets = [0, 8], sizes = [16, 4], strides = [1, 1]} : vector<16x12xf32> to vector<16x4xf32>
    %136 = arith.mulf %135, %46 : vector<16x4xf32>
    %137 = arith.addf %134, %136 : vector<16x4xf32>
    %138 = arith.mulf %132, %23 : vector<16x4xf32>
    %139 = arith.addf %137, %138 : vector<16x4xf32>
    %140 = vector.extract_strided_slice %139 {offsets = [0, 0], sizes = [8, 4], strides = [1, 1]} : vector<16x4xf32> to vector<8x4xf32>
    %141 = vector.extract_strided_slice %139 {offsets = [8, 0], sizes = [8, 4], strides = [1, 1]} : vector<16x4xf32> to vector<8x4xf32>
    %142 = arith.subf %140, %141 : vector<8x4xf32>
    %c0_45 = arith.constant 0 : index
    %c0_46 = arith.constant 0 : index
    %143 = vector.load %arg2[%c0_45, %c0_46] : memref<8x4xf32, #tpu.memory_space<vmem>>, vector<8x4xf32>
    tpu.vector_store %arg2[%c0_45, %c0_46], %142 {strides = array<i32>} : memref<8x4xf32, #tpu.memory_space<vmem>>, vector<8x4xf32>,
    return
  }
}

</mosaic_0001>

<llo_original>
// kernel: tpu_custom_call.1
$region0: #{tpu_custom_call.1}
  #allocation0 [shape = 'u32[]', space=smem, size = 0x4, offset = 0x4, fixed_abs, tag = 'smem constant byte address 0x4 - core index']
  #allocation1 [shape = 'u32[144,128]{1,0:T(1,128)}', space=vmem, size = 0x12000, scoped, tag = 'internal scratch']
  %s0 = inlined_call_operand.vmem [shape: f32[8,4], index: 0, kind: input, shape index: {}]
  %s1 = inlined_call_operand.vmem [shape: f32[120,28], index: 1, kind: input, shape index: {}]
  %s2 = inlined_call_operand.vmem [shape: f32[8,4], index: 2, kind: output, shape index: {}]
  %s3 = sld [smem:[#allocation0]]
  $region18: #{tpu_custom_call.1} parent=0
    _
  %s5 = ssub.s32 1, %s3
  %s6 = scalar_select 0, %s5, %s3
  // Predicated region
  $region2: #{tpu_custom_call.1} parent=0 // pred_check
    _
  $region3: #{tpu_custom_call.1} parent=0 // pred_check_branch
    %8 = sbr.rel (0) target = $region5
  $region4: #{tpu_custom_call.1} parent=0 // pred_region
    _
  $region5: #{tpu_custom_call.1} parent=0 // pred_fallthru
    _
  // Predicated region
  $region6: #{tpu_custom_call.1} parent=0 // pred_check
    _
  $region7: #{tpu_custom_call.1} parent=0 // pred_check_branch
    %10 = sbr.rel (0) target = $region9
  $region8: #{tpu_custom_call.1} parent=0 // pred_region
    _
  $region9: #{tpu_custom_call.1} parent=0 // pred_fallthru
    _
  %v11 = vld [vmem:[%s1] sm:$0xf]
  %v12 = vld [vmem:[%s1 + $0x8] sm:$0x1]
  %v13 = vld [vmem:[%s1 + $0x10] sm:$0xff]
  %v14 = vld [vmem:[%s1 + $0x18] sm:$0x1]
  %v15 = vld [vmem:[%s1 + $0x20] sm:$0xff]
  %v16 = vld [vmem:[%s1 + $0x28] sm:$0x1]
  %v17 = vld [vmem:[%s1 + $0x30] sm:$0xff]
  %v18 = vld [vmem:[%s1 + $0x38] sm:$0xf]
  %v19 = vld [vmem:[%s1 + $0x40] sm:$0xff]
  %v20 = vld [vmem:[%s1 + $0x48] sm:$0xf]
  %v21 = vld [vmem:[%s1 + $0x50] sm:$0xff]
  %v22 = vld [vmem:[%s1 + $0x58] sm:$0xf]
  %v23 = vld [vmem:[%s1 + $0x60] sm:$0xf]
  %v24 = vld [vmem:[%s1 + $0x68] sm:$0xff]
  %v25 = vld [vmem:[%s1 + $0x70] sm:$0xff]
  %v26 = vld [vmem:[%s0] sm:$0xff]
  %v27 = vlog2.pop %v26
  %v28 = vmul.f32 %v27, 0.6931472
  %v29 = vsub.f32 0.0, %v28
  %v30 = vlaneseq
  %v31 = vshrl.u32 %v30, 7
  %v32 = vsub.s32 0, %v31
  %v33 = vrot.slane %v12, %v32
  %vm34 = vcmask 31744
  %v36 = vsel %vm34, %v26, 0
  %vm38 = vcmask 1043456
  %v40 = vsel %vm38, %v11, 0
  %42 = vmatprep.subr.mxu0 0.0
  %43 = vmatpush1.msra.mxu0 %v40
  %44 = vmatprep.subr.mxu0 0.0
  %45 = vmatpush1.msra.mxu0 0.0
  %46 = vmatprep.subr.mxu0 0.0
  %47 = vmatpush1.msra.mxu0 0.0
  %48 = vmatprep.subr.mxu0 0.0
  %49 = vmatpush1.msra.mxu0 0.0
  %50 = vmatprep.subr.mxu0 0.0
  %51 = vmatpush1.msra.mxu0 0.0
  %52 = vmatprep.subr.mxu0 0.0
  %53 = vmatpush1.msra.mxu0 0.0
  %54 = vmatprep.subr.mxu0 0.0
  %55 = vmatpush1.msra.mxu0 0.0
  %56 = vmatprep.subr.mxu0 0.0
  %57 = vmatpush1.msra.mxu0 0.0
  %58 = vmatprep.subr.mxu0 0.0
  %59 = vmatpush1.msra.mxu0 0.0
  %60 = vmatprep.subr.mxu0 0.0
  %61 = vmatpush1.msra.mxu0 0.0
  %62 = vmatprep.subr.mxu0 0.0
  %63 = vmatpush1.msra.mxu0 0.0
  %64 = vmatprep.subr.mxu0 0.0
  %65 = vmatpush1.msra.mxu0 0.0
  %66 = vmatprep.subr.mxu0 0.0
  %67 = vmatpush1.msra.mxu0 0.0
  %68 = vmatprep.subr.mxu0 0.0
  %69 = vmatpush1.msra.mxu0 0.0
  %70 = vmatprep.subr.mxu0 0.0
  %71 = vmatpush1.msra.mxu0 0.0
  %72 = vmatprep.subr.mxu0 0.0
  %73 = vmatpush1.msra.mxu0 0.0
  %74 = vmatprep.subr.mxu0 0.0
  %75 = vmatpush1.msra.mxu0 0.0
  %76 = vmatprep.subr.mxu0 0.0
  %77 = vmatpush1.msra.mxu0 0.0
  %78 = vmatprep.subr.mxu0 0.0
  %79 = vmatpush1.msra.mxu0 0.0
  %80 = vmatprep.subr.mxu0 0.0
  %81 = vmatpush1.msra.mxu0 0.0
  %82 = vmatprep.subr.mxu0 0.0
  %83 = vmatpush1.msra.mxu0 0.0
  %84 = vmatprep.subr.mxu0 0.0
  %85 = vmatpush1.msra.mxu0 0.0
  %86 = vmatprep.subr.mxu0 0.0
  %87 = vmatpush1.msra.mxu0 0.0
  %88 = vmatprep.subr.mxu0 0.0
  %89 = vmatpush1.msra.mxu0 0.0
  %90 = vmatprep.subr.mxu0 0.0
  %91 = vmatpush1.msra.mxu0 0.0
  %92 = vmatprep.subr.mxu0 0.0
  %93 = vmatpush1.msra.mxu0 0.0
  %94 = vmatprep.subr.mxu0 0.0
  %95 = vmatpush1.msra.mxu0 0.0
  %96 = vmatprep.subr.mxu0 0.0
  %97 = vmatpush1.msra.mxu0 0.0
  %98 = vmatprep.subr.mxu0 0.0
  %99 = vmatpush1.msra.mxu0 0.0
  %100 = vmatprep.subr.mxu0 0.0
  %101 = vmatpush1.msra.mxu0 0.0
  %102 = vmatprep.subr.mxu0 0.0
  %103 = vmatpush1.msra.mxu0 0.0
  %104 = vmatprep.subr.mxu0 0.0
  %105 = vmatpush1.msra.mxu0 0.0
  %106 = vmatprep.mubr.f32.mxu0 0.0
  %107 = vmatmul.mubr.f32.gmra.mrb[0].mxu0 %v36
  %v108 = vpop.f32.mrb[0].mxu0
  %v109 = vadd.f32 %v33, %v108
  %v110 = vpop.f32.mrb[0].mxu0
  %111 = vmatprep.mubr.f32.mxu0 0.0
  %112 = vmatmul.mubr.f32.gmra.mrb[0].mxu0 %v36
  %v113 = vpop.f32.mrb[0].mxu0
  %v114 = vadd.f32 %v33, %v113
  %v115 = vpop.f32.mrb[0].mxu0
  %116 = vdwg.mxu0
  %v117 = vmax.f32 %v109, 0.0
  %v118 = vmax.f32 %v114, 0.0
  %v119 = vand.u32 2147483647, %v109
  %v120 = vand.u32 2147483647, %v114
  %v121 = vsub.f32 0.0, %v119
  %v122 = vsub.f32 0.0, %v120
  %v123 = vmul.f32 %v121, 1.442695
  %v124 = vpow.pop %v123
  %v125 = vmul.f32 %v122, 1.442695
  %v126 = vpow.pop %v125
  %v127 = vadd.f32 %v124, 1.0
  %v128 = vlog2.pop %v127
  %v129 = vmul.f32 %v128, 0.6931472
  %v130 = vmul.f32 -0.5, %v124
  %v131 = vadd.f32 %v130, 1.0
  %v132 = vmul.f32 %v131, %v124
  %v133 = vand.u32 2147483647, %v124
  %vm134 = vcmp.lt.f32.partialorder %v133, 0.0004427343
  %v135 = vsel %vm134, %v132, %v129
  %v136 = vadd.f32 %v126, 1.0
  %v137 = vlog2.pop %v136
  %v138 = vmul.f32 %v137, 0.6931472
  %v139 = vmul.f32 -0.5, %v126
  %v140 = vadd.f32 %v139, 1.0
  %v141 = vmul.f32 %v140, %v126
  %v142 = vand.u32 2147483647, %v126
  %vm143 = vcmp.lt.f32.partialorder %v142, 0.0004427343
  %v144 = vsel %vm143, %v141, %v138
  %v145 = vadd.f32 %v117, %v135
  %v146 = vadd.f32 %v118, %v144
  %v147 = vlaneseq
  %v148 = vshrl.u32 %v147, 7
  %v149 = vsub.s32 0, %v148
  %v150 = vrot.slane %v14, %v149
  %153 = vrot.lane.b32.xlu0 %v145, 116
  %v154 = vpop.permute.xlu0 %153
  %155 = vrot.lane.b32.xlu0 %v146, 116
  %v156 = vpop.permute.xlu0 %155
  %vm157 = vcmask 64512
  %v158 = vsel %vm157, %v154, 0
  %v160 = vsel %vm157, %v156, 0
  %162 = vmatprep.subr.mxu0 0.0
  %163 = vmatpush1.msra.mxu0 %v13
  %164 = vmatprep.subr.mxu0 0.0
  %165 = vmatpush1.msra.mxu0 0.0
  %166 = vmatprep.subr.mxu0 0.0
  %167 = vmatpush1.msra.mxu0 0.0
  %168 = vmatprep.subr.mxu0 0.0
  %169 = vmatpush1.msra.mxu0 0.0
  %170 = vmatprep.subr.mxu0 0.0
  %171 = vmatpush1.msra.mxu0 0.0
  %172 = vmatprep.subr.mxu0 0.0
  %173 = vmatpush1.msra.mxu0 0.0
  %174 = vmatprep.subr.mxu0 0.0
  %175 = vmatpush1.msra.mxu0 0.0
  %176 = vmatprep.subr.mxu0 0.0
  %177 = vmatpush1.msra.mxu0 0.0
  %178 = vmatprep.subr.mxu0 0.0
  %179 = vmatpush1.msra.mxu0 0.0
  %180 = vmatprep.subr.mxu0 0.0
  %181 = vmatpush1.msra.mxu0 0.0
  %182 = vmatprep.subr.mxu0 0.0
  %183 = vmatpush1.msra.mxu0 0.0
  %184 = vmatprep.subr.mxu0 0.0
  %185 = vmatpush1.msra.mxu0 0.0
  %186 = vmatprep.subr.mxu0 0.0
  %187 = vmatpush1.msra.mxu0 0.0
  %188 = vmatprep.subr.mxu0 0.0
  %189 = vmatpush1.msra.mxu0 0.0
  %190 = vmatprep.subr.mxu0 0.0
  %191 = vmatpush1.msra.mxu0 0.0
  %192 = vmatprep.subr.mxu0 0.0
  %193 = vmatpush1.msra.mxu0 0.0
  %194 = vmatprep.subr.mxu0 0.0
  %195 = vmatpush1.msra.mxu0 0.0
  %196 = vmatprep.subr.mxu0 0.0
  %197 = vmatpush1.msra.mxu0 0.0
  %198 = vmatprep.subr.mxu0 0.0
  %199 = vmatpush1.msra.mxu0 0.0
  %200 = vmatprep.subr.mxu0 0.0
  %201 = vmatpush1.msra.mxu0 0.0
  %202 = vmatprep.subr.mxu0 0.0
  %203 = vmatpush1.msra.mxu0 0.0
  %204 = vmatprep.subr.mxu0 0.0
  %205 = vmatpush1.msra.mxu0 0.0
  %206 = vmatprep.subr.mxu0 0.0
  %207 = vmatpush1.msra.mxu0 0.0
  %208 = vmatprep.subr.mxu0 0.0
  %209 = vmatpush1.msra.mxu0 0.0
  %210 = vmatprep.subr.mxu0 0.0
  %211 = vmatpush1.msra.mxu0 0.0
  %212 = vmatprep.subr.mxu0 0.0
  %213 = vmatpush1.msra.mxu0 0.0
  %214 = vmatprep.subr.mxu0 0.0
  %215 = vmatpush1.msra.mxu0 0.0
  %216 = vmatprep.subr.mxu0 0.0
  %217 = vmatpush1.msra.mxu0 0.0
  %218 = vmatprep.subr.mxu0 0.0
  %219 = vmatpush1.msra.mxu0 0.0
  %220 = vmatprep.subr.mxu0 0.0
  %221 = vmatpush1.msra.mxu0 0.0
  %222 = vmatprep.subr.mxu0 0.0
  %223 = vmatpush1.msra.mxu0 0.0
  %224 = vmatprep.subr.mxu0 0.0
  %225 = vmatpush1.msra.mxu0 0.0
  %226 = vmatprep.mubr.f32.mxu0 0.0
  %227 = vmatmul.mubr.f32.gmra.mrb[0].mxu0 %v158
  %v228 = vpop.f32.mrb[0].mxu0
  %v229 = vadd.f32 %v150, %v228
  %v230 = vpop.f32.mrb[0].mxu0
  %231 = vmatprep.mubr.f32.mxu0 0.0
  %232 = vmatmul.mubr.f32.gmra.mrb[0].mxu0 %v160
  %v233 = vpop.f32.mrb[0].mxu0
  %v234 = vadd.f32 %v150, %v233
  %v235 = vpop.f32.mrb[0].mxu0
  %236 = vdwg.mxu0
  %v237 = vmax.f32 %v229, 0.0
  %v238 = vmax.f32 %v234, 0.0
  %v239 = vand.u32 2147483647, %v229
  %v240 = vand.u32 2147483647, %v234
  %v241 = vsub.f32 0.0, %v239
  %v242 = vsub.f32 0.0, %v240
  %v243 = vmul.f32 %v241, 1.442695
  %v244 = vpow.pop %v243
  %v245 = vmul.f32 %v242, 1.442695
  %v246 = vpow.pop %v245
  %v247 = vadd.f32 %v244, 1.0
  %v248 = vlog2.pop %v247
  %v249 = vmul.f32 %v248, 0.6931472
  %v250 = vmul.f32 -0.5, %v244
  %v251 = vadd.f32 %v250, 1.0
  %v252 = vmul.f32 %v251, %v244
  %v253 = vand.u32 2147483647, %v244
  %vm254 = vcmp.lt.f32.partialorder %v253, 0.0004427343
  %v255 = vsel %vm254, %v252, %v249
  %v256 = vadd.f32 %v246, 1.0
  %v257 = vlog2.pop %v256
  %v258 = vmul.f32 %v257, 0.6931472
  %v259 = vmul.f32 -0.5, %v246
  %v260 = vadd.f32 %v259, 1.0
  %v261 = vmul.f32 %v260, %v246
  %v262 = vand.u32 2147483647, %v246
  %vm263 = vcmp.lt.f32.partialorder %v262, 0.0004427343
  %v264 = vsel %vm263, %v261, %v258
  %v265 = vadd.f32 %v237, %v255
  %v266 = vadd.f32 %v238, %v264
  %v267 = vlaneseq
  %v268 = vshrl.u32 %v267, 7
  %v269 = vsub.s32 0, %v268
  %v270 = vrot.slane %v16, %v269
  %273 = vrot.lane.b32.xlu0 %v265, 108
  %v274 = vpop.permute.xlu0 %273
  %275 = vrot.lane.b32.xlu0 %v266, 108
  %v276 = vpop.permute.xlu0 %275
  %v277 = vsel %vm157, %v274, 0
  %v279 = vsel %vm157, %v276, 0
  %281 = vmatprep.subr.mxu0 0.0
  %282 = vmatpush1.msra.mxu0 %v15
  %283 = vmatprep.subr.mxu0 0.0
  %284 = vmatpush1.msra.mxu0 0.0
  %285 = vmatprep.subr.mxu0 0.0
  %286 = vmatpush1.msra.mxu0 0.0
  %287 = vmatprep.subr.mxu0 0.0
  %288 = vmatpush1.msra.mxu0 0.0
  %289 = vmatprep.subr.mxu0 0.0
  %290 = vmatpush1.msra.mxu0 0.0
  %291 = vmatprep.subr.mxu0 0.0
  %292 = vmatpush1.msra.mxu0 0.0
  %293 = vmatprep.subr.mxu0 0.0
  %294 = vmatpush1.msra.mxu0 0.0
  %295 = vmatprep.subr.mxu0 0.0
  %296 = vmatpush1.msra.mxu0 0.0
  %297 = vmatprep.subr.mxu0 0.0
  %298 = vmatpush1.msra.mxu0 0.0
  %299 = vmatprep.subr.mxu0 0.0
  %300 = vmatpush1.msra.mxu0 0.0
  %301 = vmatprep.subr.mxu0 0.0
  %302 = vmatpush1.msra.mxu0 0.0
  %303 = vmatprep.subr.mxu0 0.0
  %304 = vmatpush1.msra.mxu0 0.0
  %305 = vmatprep.subr.mxu0 0.0
  %306 = vmatpush1.msra.mxu0 0.0
  %307 = vmatprep.subr.mxu0 0.0
  %308 = vmatpush1.msra.mxu0 0.0
  %309 = vmatprep.subr.mxu0 0.0
  %310 = vmatpush1.msra.mxu0 0.0
  %311 = vmatprep.subr.mxu0 0.0
  %312 = vmatpush1.msra.mxu0 0.0
  %313 = vmatprep.subr.mxu0 0.0
  %314 = vmatpush1.msra.mxu0 0.0
  %315 = vmatprep.subr.mxu0 0.0
  %316 = vmatpush1.msra.mxu0 0.0
  %317 = vmatprep.subr.mxu0 0.0
  %318 = vmatpush1.msra.mxu0 0.0
  %319 = vmatprep.subr.mxu0 0.0
  %320 = vmatpush1.msra.mxu0 0.0
  %321 = vmatprep.subr.mxu0 0.0
  %322 = vmatpush1.msra.mxu0 0.0
  %323 = vmatprep.subr.mxu0 0.0
  %324 = vmatpush1.msra.mxu0 0.0
  %325 = vmatprep.subr.mxu0 0.0
  %326 = vmatpush1.msra.mxu0 0.0
  %327 = vmatprep.subr.mxu0 0.0
  %328 = vmatpush1.msra.mxu0 0.0
  %329 = vmatprep.subr.mxu0 0.0
  %330 = vmatpush1.msra.mxu0 0.0
  %331 = vmatprep.subr.mxu0 0.0
  %332 = vmatpush1.msra.mxu0 0.0
  %333 = vmatprep.subr.mxu0 0.0
  %334 = vmatpush1.msra.mxu0 0.0
  %335 = vmatprep.subr.mxu0 0.0
  %336 = vmatpush1.msra.mxu0 0.0
  %337 = vmatprep.subr.mxu0 0.0
  %338 = vmatpush1.msra.mxu0 0.0
  %339 = vmatprep.subr.mxu0 0.0
  %340 = vmatpush1.msra.mxu0 0.0
  %341 = vmatprep.subr.mxu0 0.0
  %342 = vmatpush1.msra.mxu0 0.0
  %343 = vmatprep.subr.mxu0 0.0
  %344 = vmatpush1.msra.mxu0 0.0
  %345 = vmatprep.mubr.f32.mxu0 0.0
  %346 = vmatmul.mubr.f32.gmra.mrb[0].mxu0 %v277
  %v347 = vpop.f32.mrb[0].mxu0
  %v348 = vadd.f32 %v270, %v347
  %v349 = vpop.f32.mrb[0].mxu0
  %350 = vmatprep.mubr.f32.mxu0 0.0
  %351 = vmatmul.mubr.f32.gmra.mrb[0].mxu0 %v279
  %v352 = vpop.f32.mrb[0].mxu0
  %v353 = vadd.f32 %v270, %v352
  %v354 = vpop.f32.mrb[0].mxu0
  %355 = vdwg.mxu0
  %v356 = vmax.f32 %v348, 0.0
  %v357 = vmax.f32 %v353, 0.0
  %v358 = vand.u32 2147483647, %v348
  %v359 = vand.u32 2147483647, %v353
  %v360 = vsub.f32 0.0, %v358
  %v361 = vsub.f32 0.0, %v359
  %v362 = vmul.f32 %v360, 1.442695
  %v363 = vpow.pop %v362
  %v364 = vmul.f32 %v361, 1.442695
  %v365 = vpow.pop %v364
  %v366 = vadd.f32 %v363, 1.0
  %v367 = vlog2.pop %v366
  %v368 = vmul.f32 %v367, 0.6931472
  %v369 = vmul.f32 -0.5, %v363
  %v370 = vadd.f32 %v369, 1.0
  %v371 = vmul.f32 %v370, %v363
  %v372 = vand.u32 2147483647, %v363
  %vm373 = vcmp.lt.f32.partialorder %v372, 0.0004427343
  %v374 = vsel %vm373, %v371, %v368
  %v375 = vadd.f32 %v365, 1.0
  %v376 = vlog2.pop %v375
  %v377 = vmul.f32 %v376, 0.6931472
  %v378 = vmul.f32 -0.5, %v365
  %v379 = vadd.f32 %v378, 1.0
  %v380 = vmul.f32 %v379, %v365
  %v381 = vand.u32 2147483647, %v365
  %vm382 = vcmp.lt.f32.partialorder %v381, 0.0004427343
  %v383 = vsel %vm382, %v380, %v377
  %v384 = vadd.f32 %v356, %v374
  %v385 = vadd.f32 %v357, %v383
  %388 = vrot.lane.b32.xlu0 %v109, 120
  %v389 = vpop.permute.xlu0 %388
  %390 = vrot.lane.b32.xlu0 %v114, 120
  %v391 = vpop.permute.xlu0 %390
  %v394 = vmul.f32 %v29, %v389
  %v395 = vmul.f32 %v391, 0.0
  %398 = vrot.lane.b32.xlu0 %v229, 112
  %v399 = vpop.permute.xlu0 %398
  %400 = vrot.lane.b32.xlu0 %v234, 112
  %v401 = vpop.permute.xlu0 %400
  %v404 = vmul.f32 %v29, %v399
  %v405 = vmul.f32 %v401, 0.0
  %408 = vrot.lane.b32.xlu0 %v348, 119
  %v409 = vpop.permute.xlu0 %408
  %410 = vrot.lane.b32.xlu0 %v353, 119
  %v411 = vpop.permute.xlu0 %410
  %v414 = vmul.f32 %v29, %v409
  %v415 = vmul.f32 %v411, 0.0
  %418 = vrot.lane.b32.xlu0 %v404, 4
  %v419 = vpop.permute.xlu0 %418
  %420 = vrot.lane.b32.xlu0 %v405, 4
  %v421 = vpop.permute.xlu0 %420
  %426 = vrot.lane.b32.xlu0 %v414, 8
  %v427 = vpop.permute.xlu0 %426
  %428 = vrot.lane.b32.xlu0 %v415, 8
  %v429 = vpop.permute.xlu0 %428
  %v432 = vsel %vm34, %v394, %v419
  %v433 = vsel %vm34, %v395, %v421
  %v434 = vsel %vm157, %v432, %v427
  %v435 = vsel %vm157, %v433, %v429
  %vm436 = vcmask 97280
  %v438 = vsel %vm436, %v434, 0
  %v441 = vsel %vm436, %v435, 0
  %v444 = vsel %vm38, %v18, 0
  %446 = vmatprep.subr.mxu0 0.0
  %447 = vmatpush1.msra.mxu0 %v17
  %448 = vmatprep.subr.mxu0 0.0
  %449 = vmatpush1.msra.mxu0 %v444
  %450 = vmatprep.subr.mxu0 0.0
  %451 = vmatpush1.msra.mxu0 0.0
  %452 = vmatprep.subr.mxu0 0.0
  %453 = vmatpush1.msra.mxu0 0.0
  %454 = vmatprep.subr.mxu0 0.0
  %455 = vmatpush1.msra.mxu0 0.0
  %456 = vmatprep.subr.mxu0 0.0
  %457 = vmatpush1.msra.mxu0 0.0
  %458 = vmatprep.subr.mxu0 0.0
  %459 = vmatpush1.msra.mxu0 0.0
  %460 = vmatprep.subr.mxu0 0.0
  %461 = vmatpush1.msra.mxu0 0.0
  %462 = vmatprep.subr.mxu0 0.0
  %463 = vmatpush1.msra.mxu0 0.0
  %464 = vmatprep.subr.mxu0 0.0
  %465 = vmatpush1.msra.mxu0 0.0
  %466 = vmatprep.subr.mxu0 0.0
  %467 = vmatpush1.msra.mxu0 0.0
  %468 = vmatprep.subr.mxu0 0.0
  %469 = vmatpush1.msra.mxu0 0.0
  %470 = vmatprep.subr.mxu0 0.0
  %471 = vmatpush1.msra.mxu0 0.0
  %472 = vmatprep.subr.mxu0 0.0
  %473 = vmatpush1.msra.mxu0 0.0
  %474 = vmatprep.subr.mxu0 0.0
  %475 = vmatpush1.msra.mxu0 0.0
  %476 = vmatprep.subr.mxu0 0.0
  %477 = vmatpush1.msra.mxu0 0.0
  %478 = vmatprep.subr.mxu0 0.0
  %479 = vmatpush1.msra.mxu0 0.0
  %480 = vmatprep.subr.mxu0 0.0
  %481 = vmatpush1.msra.mxu0 0.0
  %482 = vmatprep.subr.mxu0 0.0
  %483 = vmatpush1.msra.mxu0 0.0
  %484 = vmatprep.subr.mxu0 0.0
  %485 = vmatpush1.msra.mxu0 0.0
  %486 = vmatprep.subr.mxu0 0.0
  %487 = vmatpush1.msra.mxu0 0.0
  %488 = vmatprep.subr.mxu0 0.0
  %489 = vmatpush1.msra.mxu0 0.0
  %490 = vmatprep.subr.mxu0 0.0
  %491 = vmatpush1.msra.mxu0 0.0
  %492 = vmatprep.subr.mxu0 0.0
  %493 = vmatpush1.msra.mxu0 0.0
  %494 = vmatprep.subr.mxu0 0.0
  %495 = vmatpush1.msra.mxu0 0.0
  %496 = vmatprep.subr.mxu0 0.0
  %497 = vmatpush1.msra.mxu0 0.0
  %498 = vmatprep.subr.mxu0 0.0
  %499 = vmatpush1.msra.mxu0 0.0
  %500 = vmatprep.subr.mxu0 0.0
  %501 = vmatpush1.msra.mxu0 0.0
  %502 = vmatprep.subr.mxu0 0.0
  %503 = vmatpush1.msra.mxu0 0.0
  %504 = vmatprep.subr.mxu0 0.0
  %505 = vmatpush1.msra.mxu0 0.0
  %506 = vmatprep.subr.mxu0 0.0
  %507 = vmatpush1.msra.mxu0 0.0
  %508 = vmatprep.subr.mxu0 0.0
  %509 = vmatpush1.msra.mxu0 0.0
  %510 = vmatprep.mubr.f32.mxu0 0.0
  %511 = vmatmul.mubr.f32.gmra.mrb[0].mxu0 %v438
  %v512 = vpop.f32.mrb[0].mxu0
  %v513 = vadd.f32 0.0, %v512
  %v514 = vpop.f32.mrb[0].mxu0
  %515 = vmatprep.mubr.f32.mxu0 0.0
  %516 = vmatmul.mubr.f32.gmra.mrb[0].mxu0 %v441
  %v517 = vpop.f32.mrb[0].mxu0
  %v518 = vadd.f32 0.0, %v517
  %v519 = vpop.f32.mrb[0].mxu0
  %520 = vdwg.mxu0
  %v521 = vadd.f32 %v109, %v513
  %v522 = vadd.f32 %v114, %v518
  %v523 = vmax.f32 %v521, 0.0
  %v524 = vmax.f32 %v522, 0.0
  %v525 = vand.u32 2147483647, %v521
  %v526 = vand.u32 2147483647, %v522
  %v527 = vsub.f32 0.0, %v525
  %v528 = vsub.f32 0.0, %v526
  %v529 = vmul.f32 %v527, 1.442695
  %v530 = vpow.pop %v529
  %v531 = vmul.f32 %v528, 1.442695
  %v532 = vpow.pop %v531
  %v533 = vadd.f32 %v530, 1.0
  %v534 = vlog2.pop %v533
  %v535 = vmul.f32 %v534, 0.6931472
  %v536 = vmul.f32 -0.5, %v530
  %v537 = vadd.f32 %v536, 1.0
  %v538 = vmul.f32 %v537, %v530
  %v539 = vand.u32 2147483647, %v530
  %vm540 = vcmp.lt.f32.partialorder %v539, 0.0004427343
  %v541 = vsel %vm540, %v538, %v535
  %v542 = vadd.f32 %v532, 1.0
  %v543 = vlog2.pop %v542
  %v544 = vmul.f32 %v543, 0.6931472
  %v545 = vmul.f32 -0.5, %v532
  %v546 = vadd.f32 %v545, 1.0
  %v547 = vmul.f32 %v546, %v532
  %v548 = vand.u32 2147483647, %v532
  %vm549 = vcmp.lt.f32.partialorder %v548, 0.0004427343
  %v550 = vsel %vm549, %v547, %v544
  %v551 = vadd.f32 %v523, %v541
  %v552 = vadd.f32 %v524, %v550
  %553 = vrot.lane.b32.xlu0 %v265, 120
  %v554 = vpop.permute.xlu0 %553
  %555 = vrot.lane.b32.xlu0 %v266, 120
  %v556 = vpop.permute.xlu0 %555
  %v559 = vmul.f32 %v551, %v554
  %v560 = vmul.f32 %v552, %v556
  %v562 = vsel %vm157, %v559, 0
  %v565 = vsel %vm157, %v560, 0
  %567 = vmatprep.subr.mxu0 0.0
  %568 = vmatpush1.msra.mxu0 %v24
  %569 = vmatprep.subr.mxu0 0.0
  %570 = vmatpush1.msra.mxu0 0.0
  %571 = vmatprep.subr.mxu0 0.0
  %572 = vmatpush1.msra.mxu0 0.0
  %573 = vmatprep.subr.mxu0 0.0
  %574 = vmatpush1.msra.mxu0 0.0
  %575 = vmatprep.subr.mxu0 0.0
  %576 = vmatpush1.msra.mxu0 0.0
  %577 = vmatprep.subr.mxu0 0.0
  %578 = vmatpush1.msra.mxu0 0.0
  %579 = vmatprep.subr.mxu0 0.0
  %580 = vmatpush1.msra.mxu0 0.0
  %581 = vmatprep.subr.mxu0 0.0
  %582 = vmatpush1.msra.mxu0 0.0
  %583 = vmatprep.subr.mxu0 0.0
  %584 = vmatpush1.msra.mxu0 0.0
  %585 = vmatprep.subr.mxu0 0.0
  %586 = vmatpush1.msra.mxu0 0.0
  %587 = vmatprep.subr.mxu0 0.0
  %588 = vmatpush1.msra.mxu0 0.0
  %589 = vmatprep.subr.mxu0 0.0
  %590 = vmatpush1.msra.mxu0 0.0
  %591 = vmatprep.subr.mxu0 0.0
  %592 = vmatpush1.msra.mxu0 0.0
  %593 = vmatprep.subr.mxu0 0.0
  %594 = vmatpush1.msra.mxu0 0.0
  %595 = vmatprep.subr.mxu0 0.0
  %596 = vmatpush1.msra.mxu0 0.0
  %597 = vmatprep.subr.mxu0 0.0
  %598 = vmatpush1.msra.mxu0 0.0
  %599 = vmatprep.subr.mxu0 0.0
  %600 = vmatpush1.msra.mxu0 0.0
  %601 = vmatprep.subr.mxu0 0.0
  %602 = vmatpush1.msra.mxu0 0.0
  %603 = vmatprep.subr.mxu0 0.0
  %604 = vmatpush1.msra.mxu0 0.0
  %605 = vmatprep.subr.mxu0 0.0
  %606 = vmatpush1.msra.mxu0 0.0
  %607 = vmatprep.subr.mxu0 0.0
  %608 = vmatpush1.msra.mxu0 0.0
  %609 = vmatprep.subr.mxu0 0.0
  %610 = vmatpush1.msra.mxu0 0.0
  %611 = vmatprep.subr.mxu0 0.0
  %612 = vmatpush1.msra.mxu0 0.0
  %613 = vmatprep.subr.mxu0 0.0
  %614 = vmatpush1.msra.mxu0 0.0
  %615 = vmatprep.subr.mxu0 0.0
  %616 = vmatpush1.msra.mxu0 0.0
  %617 = vmatprep.subr.mxu0 0.0
  %618 = vmatpush1.msra.mxu0 0.0
  %619 = vmatprep.subr.mxu0 0.0
  %620 = vmatpush1.msra.mxu0 0.0
  %621 = vmatprep.subr.mxu0 0.0
  %622 = vmatpush1.msra.mxu0 0.0
  %623 = vmatprep.subr.mxu0 0.0
  %624 = vmatpush1.msra.mxu0 0.0
  %625 = vmatprep.subr.mxu0 0.0
  %626 = vmatpush1.msra.mxu0 0.0
  %627 = vmatprep.subr.mxu0 0.0
  %628 = vmatpush1.msra.mxu0 0.0
  %629 = vmatprep.subr.mxu0 0.0
  %630 = vmatpush1.msra.mxu0 0.0
  %631 = vmatprep.mubr.f32.mxu0 0.0
  %632 = vmatmul.mubr.f32.gmra.mrb[0].mxu0 %v562
  %v633 = vpop.f32.mrb[0].mxu0
  %v634 = vadd.f32 0.0, %v633
  %v635 = vpop.f32.mrb[0].mxu0
  %636 = vmatprep.mubr.f32.mxu0 0.0
  %637 = vmatmul.mubr.f32.gmra.mrb[0].mxu0 %v565
  %v638 = vpop.f32.mrb[0].mxu0
  %v639 = vadd.f32 0.0, %v638
  %v640 = vpop.f32.mrb[0].mxu0
  %641 = vdwg.mxu0
  %v642 = vadd.f32 %v229, %v634
  %v643 = vadd.f32 %v234, %v639
  %646 = vrot.lane.b32.xlu0 %v513, 120
  %v647 = vpop.permute.xlu0 %646
  %648 = vrot.lane.b32.xlu0 %v518, 120
  %v649 = vpop.permute.xlu0 %648
  %v652 = vadd.f32 %v642, %v647
  %v653 = vadd.f32 %v643, %v649
  %v654 = vmax.f32 %v652, 0.0
  %v655 = vmax.f32 %v653, 0.0
  %v656 = vand.u32 2147483647, %v652
  %v657 = vand.u32 2147483647, %v653
  %v658 = vsub.f32 0.0, %v656
  %v659 = vsub.f32 0.0, %v657
  %v660 = vmul.f32 %v658, 1.442695
  %v661 = vpow.pop %v660
  %v662 = vmul.f32 %v659, 1.442695
  %v663 = vpow.pop %v662
  %v664 = vadd.f32 %v661, 1.0
  %v665 = vlog2.pop %v664
  %v666 = vmul.f32 %v665, 0.6931472
  %v667 = vmul.f32 -0.5, %v661
  %v668 = vadd.f32 %v667, 1.0
  %v669 = vmul.f32 %v668, %v661
  %v670 = vand.u32 2147483647, %v661
  %vm671 = vcmp.lt.f32.partialorder %v670, 0.0004427343
  %v672 = vsel %vm671, %v669, %v666
  %v673 = vadd.f32 %v663, 1.0
  %v674 = vlog2.pop %v673
  %v675 = vmul.f32 %v674, 0.6931472
  %v676 = vmul.f32 -0.5, %v663
  %v677 = vadd.f32 %v676, 1.0
  %v678 = vmul.f32 %v677, %v663
  %v679 = vand.u32 2147483647, %v663
  %vm680 = vcmp.lt.f32.partialorder %v679, 0.0004427343
  %v681 = vsel %vm680, %v678, %v675
  %v682 = vadd.f32 %v654, %v672
  %v683 = vadd.f32 %v655, %v681
  %686 = vrot.lane.b32.xlu0 %v384, 127
  %v687 = vpop.permute.xlu0 %686
  %688 = vrot.lane.b32.xlu0 %v385, 127
  %v689 = vpop.permute.xlu0 %688
  %v692 = vmul.f32 %v682, %v687
  %v693 = vmul.f32 %v683, %v689
  %v695 = vsel %vm157, %v692, 0
  %v698 = vsel %vm157, %v693, 0
  %700 = vmatprep.subr.mxu0 0.0
  %701 = vmatpush1.msra.mxu0 %v25
  %702 = vmatprep.subr.mxu0 0.0
  %703 = vmatpush1.msra.mxu0 0.0
  %704 = vmatprep.subr.mxu0 0.0
  %705 = vmatpush1.msra.mxu0 0.0
  %706 = vmatprep.subr.mxu0 0.0
  %707 = vmatpush1.msra.mxu0 0.0
  %708 = vmatprep.subr.mxu0 0.0
  %709 = vmatpush1.msra.mxu0 0.0
  %710 = vmatprep.subr.mxu0 0.0
  %711 = vmatpush1.msra.mxu0 0.0
  %712 = vmatprep.subr.mxu0 0.0
  %713 = vmatpush1.msra.mxu0 0.0
  %714 = vmatprep.subr.mxu0 0.0
  %715 = vmatpush1.msra.mxu0 0.0
  %716 = vmatprep.subr.mxu0 0.0
  %717 = vmatpush1.msra.mxu0 0.0
  %718 = vmatprep.subr.mxu0 0.0
  %719 = vmatpush1.msra.mxu0 0.0
  %720 = vmatprep.subr.mxu0 0.0
  %721 = vmatpush1.msra.mxu0 0.0
  %722 = vmatprep.subr.mxu0 0.0
  %723 = vmatpush1.msra.mxu0 0.0
  %724 = vmatprep.subr.mxu0 0.0
  %725 = vmatpush1.msra.mxu0 0.0
  %726 = vmatprep.subr.mxu0 0.0
  %727 = vmatpush1.msra.mxu0 0.0
  %728 = vmatprep.subr.mxu0 0.0
  %729 = vmatpush1.msra.mxu0 0.0
  %730 = vmatprep.subr.mxu0 0.0
  %731 = vmatpush1.msra.mxu0 0.0
  %732 = vmatprep.subr.mxu0 0.0
  %733 = vmatpush1.msra.mxu0 0.0
  %734 = vmatprep.subr.mxu0 0.0
  %735 = vmatpush1.msra.mxu0 0.0
  %736 = vmatprep.subr.mxu0 0.0
  %737 = vmatpush1.msra.mxu0 0.0
  %738 = vmatprep.subr.mxu0 0.0
  %739 = vmatpush1.msra.mxu0 0.0
  %740 = vmatprep.subr.mxu0 0.0
  %741 = vmatpush1.msra.mxu0 0.0
  %742 = vmatprep.subr.mxu0 0.0
  %743 = vmatpush1.msra.mxu0 0.0
  %744 = vmatprep.subr.mxu0 0.0
  %745 = vmatpush1.msra.mxu0 0.0
  %746 = vmatprep.subr.mxu0 0.0
  %747 = vmatpush1.msra.mxu0 0.0
  %748 = vmatprep.subr.mxu0 0.0
  %749 = vmatpush1.msra.mxu0 0.0
  %750 = vmatprep.subr.mxu0 0.0
  %751 = vmatpush1.msra.mxu0 0.0
  %752 = vmatprep.subr.mxu0 0.0
  %753 = vmatpush1.msra.mxu0 0.0
  %754 = vmatprep.subr.mxu0 0.0
  %755 = vmatpush1.msra.mxu0 0.0
  %756 = vmatprep.subr.mxu0 0.0
  %757 = vmatpush1.msra.mxu0 0.0
  %758 = vmatprep.subr.mxu0 0.0
  %759 = vmatpush1.msra.mxu0 0.0
  %760 = vmatprep.subr.mxu0 0.0
  %761 = vmatpush1.msra.mxu0 0.0
  %762 = vmatprep.subr.mxu0 0.0
  %763 = vmatpush1.msra.mxu0 0.0
  %764 = vmatprep.mubr.f32.mxu0 0.0
  %765 = vmatmul.mubr.f32.gmra.mrb[0].mxu0 %v695
  %v766 = vpop.f32.mrb[0].mxu0
  %v767 = vadd.f32 0.0, %v766
  %v768 = vpop.f32.mrb[0].mxu0
  %769 = vmatprep.mubr.f32.mxu0 0.0
  %770 = vmatmul.mubr.f32.gmra.mrb[0].mxu0 %v698
  %v771 = vpop.f32.mrb[0].mxu0
  %v772 = vadd.f32 0.0, %v771
  %v773 = vpop.f32.mrb[0].mxu0
  %774 = vdwg.mxu0
  %v775 = vadd.f32 %v348, %v767
  %v776 = vadd.f32 %v353, %v772
  %777 = vrot.lane.b32.xlu0 %v513, 112
  %v778 = vpop.permute.xlu0 %777
  %779 = vrot.lane.b32.xlu0 %v518, 112
  %v780 = vpop.permute.xlu0 %779
  %v783 = vadd.f32 %v775, %v778
  %v784 = vadd.f32 %v776, %v780
  %v785 = vmul.f32 %v783, 0.5
  %v786 = vmul.f32 %v784, 0.5
  %v787 = vtanh.pop %v785
  %v788 = vtanh.pop %v786
  %v789 = vadd.f32 %v787, 1.0
  %v790 = vadd.f32 %v788, 1.0
  %v791 = vmul.f32 %v789, 0.5
  %v792 = vmul.f32 %v790, 0.5
  %vm793 = vcmask 7168
  %v795 = vsel %vm793, %v791, 0
  %v798 = vsel %vm793, %v792, 0
  %v801 = vsel %vm793, %v19, 0
  %v804 = vsel %vm793, %v20, 0
  %806 = vmatprep.subr.mxu0 0.0
  %807 = vmatpush1.xpose.msra.mxu0 %v801
  %808 = vmatprep.subr.mxu0 0.0
  %809 = vmatpush1.xpose.msra.mxu0 %v804
  %810 = vmatprep.subr.mxu0 0.0
  %811 = vmatpush1.xpose.msra.mxu0 0.0
  %812 = vmatprep.subr.mxu0 0.0
  %813 = vmatpush1.xpose.msra.mxu0 0.0
  %814 = vmatprep.subr.mxu0 0.0
  %815 = vmatpush1.xpose.msra.mxu0 0.0
  %816 = vmatprep.subr.mxu0 0.0
  %817 = vmatpush1.xpose.msra.mxu0 0.0
  %818 = vmatprep.subr.mxu0 0.0
  %819 = vmatpush1.xpose.msra.mxu0 0.0
  %820 = vmatprep.subr.mxu0 0.0
  %821 = vmatpush1.xpose.msra.mxu0 0.0
  %822 = vmatprep.subr.mxu0 0.0
  %823 = vmatpush1.xpose.msra.mxu0 0.0
  %824 = vmatprep.subr.mxu0 0.0
  %825 = vmatpush1.xpose.msra.mxu0 0.0
  %826 = vmatprep.subr.mxu0 0.0
  %827 = vmatpush1.xpose.msra.mxu0 0.0
  %828 = vmatprep.subr.mxu0 0.0
  %829 = vmatpush1.xpose.msra.mxu0 0.0
  %830 = vmatprep.subr.mxu0 0.0
  %831 = vmatpush1.xpose.msra.mxu0 0.0
  %832 = vmatprep.subr.mxu0 0.0
  %833 = vmatpush1.xpose.msra.mxu0 0.0
  %834 = vmatprep.subr.mxu0 0.0
  %835 = vmatpush1.xpose.msra.mxu0 0.0
  %836 = vmatprep.subr.mxu0 0.0
  %837 = vmatpush1.xpose.msra.mxu0 0.0
  %838 = vmatprep.subr.mxu0 0.0
  %839 = vmatpush1.xpose.msra.mxu0 0.0
  %840 = vmatprep.subr.mxu0 0.0
  %841 = vmatpush1.xpose.msra.mxu0 0.0
  %842 = vmatprep.subr.mxu0 0.0
  %843 = vmatpush1.xpose.msra.mxu0 0.0
  %844 = vmatprep.subr.mxu0 0.0
  %845 = vmatpush1.xpose.msra.mxu0 0.0
  %846 = vmatprep.subr.mxu0 0.0
  %847 = vmatpush1.xpose.msra.mxu0 0.0
  %848 = vmatprep.subr.mxu0 0.0
  %849 = vmatpush1.xpose.msra.mxu0 0.0
  %850 = vmatprep.subr.mxu0 0.0
  %851 = vmatpush1.xpose.msra.mxu0 0.0
  %852 = vmatprep.subr.mxu0 0.0
  %853 = vmatpush1.xpose.msra.mxu0 0.0
  %854 = vmatprep.subr.mxu0 0.0
  %855 = vmatpush1.xpose.msra.mxu0 0.0
  %856 = vmatprep.subr.mxu0 0.0
  %857 = vmatpush1.xpose.msra.mxu0 0.0
  %858 = vmatprep.subr.mxu0 0.0
  %859 = vmatpush1.xpose.msra.mxu0 0.0
  %860 = vmatprep.subr.mxu0 0.0
  %861 = vmatpush1.xpose.msra.mxu0 0.0
  %862 = vmatprep.subr.mxu0 0.0
  %863 = vmatpush1.xpose.msra.mxu0 0.0
  %864 = vmatprep.subr.mxu0 0.0
  %865 = vmatpush1.xpose.msra.mxu0 0.0
  %866 = vmatprep.subr.mxu0 0.0
  %867 = vmatpush1.xpose.msra.mxu0 0.0
  %868 = vmatprep.subr.mxu0 0.0
  %869 = vmatpush1.xpose.msra.mxu0 0.0
  %870 = vmatprep.mubr.f32.mxu0 0.0
  %871 = vmatmul.mubr.f32.gmra.mrb[0].mxu0 %v795
  %v872 = vpop.f32.mrb[0].mxu0
  %v873 = vadd.f32 0.0, %v872
  %v874 = vpop.f32.mrb[0].mxu0
  %875 = vmatprep.mubr.f32.mxu0 0.0
  %876 = vmatmul.mubr.f32.gmra.mrb[0].mxu0 %v798
  %v877 = vpop.f32.mrb[0].mxu0
  %v878 = vadd.f32 0.0, %v877
  %v879 = vpop.f32.mrb[0].mxu0
  %880 = vdwg.mxu0
  %v881 = vmul.f32 %v873, %v687
  %v882 = vmul.f32 %v878, %v689
  %v883 = vmul.f32 %v652, 0.5
  %v884 = vmul.f32 %v653, 0.5
  %v885 = vtanh.pop %v883
  %v886 = vtanh.pop %v884
  %v887 = vadd.f32 %v885, 1.0
  %v888 = vadd.f32 %v886, 1.0
  %v889 = vmul.f32 %v887, 0.5
  %v890 = vmul.f32 %v888, 0.5
  %v891 = vmul.f32 %v881, %v889
  %v892 = vmul.f32 %v882, %v890
  %v894 = vsel %vm157, %v891, 0
  %v897 = vsel %vm157, %v892, 0
  %v900 = vsel %vm157, %v21, 0
  %v903 = vsel %vm157, %v22, 0
  %905 = vmatprep.subr.mxu0 0.0
  %906 = vmatpush1.xpose.msra.mxu0 %v900
  %907 = vmatprep.subr.mxu0 0.0
  %908 = vmatpush1.xpose.msra.mxu0 %v903
  %909 = vmatprep.subr.mxu0 0.0
  %910 = vmatpush1.xpose.msra.mxu0 0.0
  %911 = vmatprep.subr.mxu0 0.0
  %912 = vmatpush1.xpose.msra.mxu0 0.0
  %913 = vmatprep.subr.mxu0 0.0
  %914 = vmatpush1.xpose.msra.mxu0 0.0
  %915 = vmatprep.subr.mxu0 0.0
  %916 = vmatpush1.xpose.msra.mxu0 0.0
  %917 = vmatprep.subr.mxu0 0.0
  %918 = vmatpush1.xpose.msra.mxu0 0.0
  %919 = vmatprep.subr.mxu0 0.0
  %920 = vmatpush1.xpose.msra.mxu0 0.0
  %921 = vmatprep.subr.mxu0 0.0
  %922 = vmatpush1.xpose.msra.mxu0 0.0
  %923 = vmatprep.subr.mxu0 0.0
  %924 = vmatpush1.xpose.msra.mxu0 0.0
  %925 = vmatprep.subr.mxu0 0.0
  %926 = vmatpush1.xpose.msra.mxu0 0.0
  %927 = vmatprep.subr.mxu0 0.0
  %928 = vmatpush1.xpose.msra.mxu0 0.0
  %929 = vmatprep.subr.mxu0 0.0
  %930 = vmatpush1.xpose.msra.mxu0 0.0
  %931 = vmatprep.subr.mxu0 0.0
  %932 = vmatpush1.xpose.msra.mxu0 0.0
  %933 = vmatprep.subr.mxu0 0.0
  %934 = vmatpush1.xpose.msra.mxu0 0.0
  %935 = vmatprep.subr.mxu0 0.0
  %936 = vmatpush1.xpose.msra.mxu0 0.0
  %937 = vmatprep.subr.mxu0 0.0
  %938 = vmatpush1.xpose.msra.mxu0 0.0
  %939 = vmatprep.subr.mxu0 0.0
  %940 = vmatpush1.xpose.msra.mxu0 0.0
  %941 = vmatprep.subr.mxu0 0.0
  %942 = vmatpush1.xpose.msra.mxu0 0.0
  %943 = vmatprep.subr.mxu0 0.0
  %944 = vmatpush1.xpose.msra.mxu0 0.0
  %945 = vmatprep.subr.mxu0 0.0
  %946 = vmatpush1.xpose.msra.mxu0 0.0
  %947 = vmatprep.subr.mxu0 0.0
  %948 = vmatpush1.xpose.msra.mxu0 0.0
  %949 = vmatprep.subr.mxu0 0.0
  %950 = vmatpush1.xpose.msra.mxu0 0.0
  %951 = vmatprep.subr.mxu0 0.0
  %952 = vmatpush1.xpose.msra.mxu0 0.0
  %953 = vmatprep.subr.mxu0 0.0
  %954 = vmatpush1.xpose.msra.mxu0 0.0
  %955 = vmatprep.subr.mxu0 0.0
  %956 = vmatpush1.xpose.msra.mxu0 0.0
  %957 = vmatprep.subr.mxu0 0.0
  %958 = vmatpush1.xpose.msra.mxu0 0.0
  %959 = vmatprep.subr.mxu0 0.0
  %960 = vmatpush1.xpose.msra.mxu0 0.0
  %961 = vmatprep.subr.mxu0 0.0
  %962 = vmatpush1.xpose.msra.mxu0 0.0
  %963 = vmatprep.subr.mxu0 0.0
  %964 = vmatpush1.xpose.msra.mxu0 0.0
  %965 = vmatprep.subr.mxu0 0.0
  %966 = vmatpush1.xpose.msra.mxu0 0.0
  %967 = vmatprep.subr.mxu0 0.0
  %968 = vmatpush1.xpose.msra.mxu0 0.0
  %969 = vmatprep.mubr.f32.mxu0 0.0
  %970 = vmatmul.mubr.f32.gmra.mrb[0].mxu0 %v894
  %v971 = vpop.f32.mrb[0].mxu0
  %v972 = vadd.f32 0.0, %v971
  %v973 = vpop.f32.mrb[0].mxu0
  %974 = vmatprep.mubr.f32.mxu0 0.0
  %975 = vmatmul.mubr.f32.gmra.mrb[0].mxu0 %v897
  %v976 = vpop.f32.mrb[0].mxu0
  %v977 = vadd.f32 0.0, %v976
  %v978 = vpop.f32.mrb[0].mxu0
  %979 = vdwg.mxu0
  %v980 = vmul.f32 %v972, %v554
  %v981 = vmul.f32 %v977, %v556
  %v982 = vmul.f32 %v521, 0.5
  %v983 = vmul.f32 %v522, 0.5
  %v984 = vtanh.pop %v982
  %v985 = vtanh.pop %v983
  %v986 = vadd.f32 %v984, 1.0
  %v987 = vadd.f32 %v985, 1.0
  %v988 = vmul.f32 %v986, 0.5
  %v989 = vmul.f32 %v987, 0.5
  %v990 = vmul.f32 %v980, %v988
  %v991 = vmul.f32 %v981, %v989
  %v993 = vsel %vm157, %v990, 0
  %v996 = vsel %vm157, %v991, 0
  %v999 = vsel %vm157, %v23, 0
  %1001 = vmatprep.subr.mxu0 0.0
  %1002 = vmatpush1.xpose.msra.mxu0 %v999
  %1003 = vmatprep.subr.mxu0 0.0
  %1004 = vmatpush1.xpose.msra.mxu0 0.0
  %1005 = vmatprep.subr.mxu0 0.0
  %1006 = vmatpush1.xpose.msra.mxu0 0.0
  %1007 = vmatprep.subr.mxu0 0.0
  %1008 = vmatpush1.xpose.msra.mxu0 0.0
  %1009 = vmatprep.subr.mxu0 0.0
  %1010 = vmatpush1.xpose.msra.mxu0 0.0
  %1011 = vmatprep.subr.mxu0 0.0
  %1012 = vmatpush1.xpose.msra.mxu0 0.0
  %1013 = vmatprep.subr.mxu0 0.0
  %1014 = vmatpush1.xpose.msra.mxu0 0.0
  %1015 = vmatprep.subr.mxu0 0.0
  %1016 = vmatpush1.xpose.msra.mxu0 0.0
  %1017 = vmatprep.subr.mxu0 0.0
  %1018 = vmatpush1.xpose.msra.mxu0 0.0
  %1019 = vmatprep.subr.mxu0 0.0
  %1020 = vmatpush1.xpose.msra.mxu0 0.0
  %1021 = vmatprep.subr.mxu0 0.0
  %1022 = vmatpush1.xpose.msra.mxu0 0.0
  %1023 = vmatprep.subr.mxu0 0.0
  %1024 = vmatpush1.xpose.msra.mxu0 0.0
  %1025 = vmatprep.subr.mxu0 0.0
  %1026 = vmatpush1.xpose.msra.mxu0 0.0
  %1027 = vmatprep.subr.mxu0 0.0
  %1028 = vmatpush1.xpose.msra.mxu0 0.0
  %1029 = vmatprep.subr.mxu0 0.0
  %1030 = vmatpush1.xpose.msra.mxu0 0.0
  %1031 = vmatprep.subr.mxu0 0.0
  %1032 = vmatpush1.xpose.msra.mxu0 0.0
  %1033 = vmatprep.subr.mxu0 0.0
  %1034 = vmatpush1.xpose.msra.mxu0 0.0
  %1035 = vmatprep.subr.mxu0 0.0
  %1036 = vmatpush1.xpose.msra.mxu0 0.0
  %1037 = vmatprep.subr.mxu0 0.0
  %1038 = vmatpush1.xpose.msra.mxu0 0.0
  %1039 = vmatprep.subr.mxu0 0.0
  %1040 = vmatpush1.xpose.msra.mxu0 0.0
  %1041 = vmatprep.subr.mxu0 0.0
  %1042 = vmatpush1.xpose.msra.mxu0 0.0
  %1043 = vmatprep.subr.mxu0 0.0
  %1044 = vmatpush1.xpose.msra.mxu0 0.0
  %1045 = vmatprep.subr.mxu0 0.0
  %1046 = vmatpush1.xpose.msra.mxu0 0.0
  %1047 = vmatprep.subr.mxu0 0.0
  %1048 = vmatpush1.xpose.msra.mxu0 0.0
  %1049 = vmatprep.subr.mxu0 0.0
  %1050 = vmatpush1.xpose.msra.mxu0 0.0
  %1051 = vmatprep.subr.mxu0 0.0
  %1052 = vmatpush1.xpose.msra.mxu0 0.0
  %1053 = vmatprep.subr.mxu0 0.0
  %1054 = vmatpush1.xpose.msra.mxu0 0.0
  %1055 = vmatprep.subr.mxu0 0.0
  %1056 = vmatpush1.xpose.msra.mxu0 0.0
  %1057 = vmatprep.subr.mxu0 0.0
  %1058 = vmatpush1.xpose.msra.mxu0 0.0
  %1059 = vmatprep.subr.mxu0 0.0
  %1060 = vmatpush1.xpose.msra.mxu0 0.0
  %1061 = vmatprep.subr.mxu0 0.0
  %1062 = vmatpush1.xpose.msra.mxu0 0.0
  %1063 = vmatprep.subr.mxu0 0.0
  %1064 = vmatpush1.xpose.msra.mxu0 0.0
  %1065 = vmatprep.mubr.f32.mxu0 0.0
  %1066 = vmatmul.mubr.f32.gmra.mrb[0].mxu0 %v993
  %v1067 = vpop.f32.mrb[0].mxu0
  %v1068 = vadd.f32 0.0, %v1067
  %v1069 = vpop.f32.mrb[0].mxu0
  %1070 = vmatprep.mubr.f32.mxu0 0.0
  %1071 = vmatmul.mubr.f32.gmra.mrb[0].mxu0 %v996
  %v1072 = vpop.f32.mrb[0].mxu0
  %v1073 = vadd.f32 0.0, %v1072
  %v1074 = vpop.f32.mrb[0].mxu0
  %1075 = vdwg.mxu0
  %1076 = vrot.lane.b32.xlu0 %v348, 127
  %v1077 = vpop.permute.xlu0 %1076
  %1078 = vrot.lane.b32.xlu0 %v353, 127
  %v1079 = vpop.permute.xlu0 %1078
  %v1082 = vmul.f32 %v873, %v1077
  %v1083 = vmul.f32 %v878, %v1079
  %1084 = vrot.lane.b32.xlu0 %v229, 120
  %v1085 = vpop.permute.xlu0 %1084
  %1086 = vrot.lane.b32.xlu0 %v234, 120
  %v1087 = vpop.permute.xlu0 %1086
  %v1090 = vmul.f32 %v972, %v1085
  %v1091 = vmul.f32 %v977, %v1087
  %v1092 = vadd.f32 %v1082, %v1090
  %v1093 = vadd.f32 %v1083, %v1091
  %v1094 = vmul.f32 %v1068, %v389
  %v1095 = vmul.f32 %v1073, %v391
  %1098 = vrot.lane.b32.xlu0 %v1094, 8
  %v1099 = vpop.permute.xlu0 %1098
  %1100 = vrot.lane.b32.xlu0 %v1095, 8
  %v1101 = vpop.permute.xlu0 %1100
  %v1104 = vadd.f32 %v1092, %v1099
  %v1105 = vadd.f32 %v1093, %v1101
  %v1106 = vsub.f32 %v1104, %v1105
  %1108 = vrot.lane.b32.xlu0 %v1106, 120
  %v1109 = vpop.permute.xlu0 %1108
  %1111 = vst.msk [vmem:[%s2] sm:$0xff] %vm34, %v1109
  // Predicated region
  $region10: #{tpu_custom_call.1} parent=0 // pred_check
    _
  $region11: #{tpu_custom_call.1} parent=0 // pred_check_branch
    %1113 = sbr.rel (0) target = $region13
  $region12: #{tpu_custom_call.1} parent=0 // pred_region
    _
  $region13: #{tpu_custom_call.1} parent=0 // pred_fallthru
    _
  // Predicated region
  $region14: #{tpu_custom_call.1} parent=0 // pred_check
    _
  $region15: #{tpu_custom_call.1} parent=0 // pred_check_branch
    %1115 = sbr.rel (0) target = $region17
  $region16: #{tpu_custom_call.1} parent=0 // pred_region
    _
  $region17: #{tpu_custom_call.1} parent=0 // pred_fallthru
    _

</llo_original>
